<compile_context>
chip_gen: v6e
topology: v6e:2x2x1
jax: 0.10.0
libtpu: 0.0.40
codegen_flags: <defaults>
</compile_context>

<pallas_src>
import jax
import jax.numpy as jnp
from jax.experimental import pallas as pl
from jax.experimental.pallas import tpu as pltpu

OUT_PAD = 128   # lane-dense padded final output width
H4_PAD = 128    # lane-dense padded layer-4 width (64 -> 128)
MAX_TB = 512    # max batch tile (sweet spot per tiled-kernel scaling measurements)


def _round_up(x, m):
    return ((x + m - 1) // m) * m


def make_mlp_kernel(bf16_elementwise):
    """Whole MLP hot path per batch tile: 5 MXU matmuls + 4 ReLUs, all VMEM-resident."""

    def _relu_to_bf16(h):
        if bf16_elementwise:
            # v6e/v7x: packed-bf16 VALU -> cast first, ReLU in bf16 (half the lane work).
            return jnp.maximum(h.astype(jnp.bfloat16), 0.0)
        # v5e and older: no bf16 VALU path -> ReLU in f32, cast only for the next dot.
        return jnp.maximum(h, 0.0).astype(jnp.bfloat16)

    def mlp_kernel(x_ref,
                   w1_ref, b1_ref,
                   w2_ref, b2_ref,
                   w3_ref, b3_ref,
                   w4_ref, b4_ref,
                   w5_ref, b5_ref,
                   out_ref):
        # Layer 1 fully in f32: K = state_size is tiny, and this keeps the raw
        # network inputs at full precision.
        h = jnp.dot(x_ref[...], w1_ref[...],
                    preferred_element_type=jnp.float32) + b1_ref[...]
        h = _relu_to_bf16(h)

        h = jnp.dot(h, w2_ref[...],
                    preferred_element_type=jnp.float32) + b2_ref[...]
        h = _relu_to_bf16(h)

        h = jnp.dot(h, w3_ref[...],
                    preferred_element_type=jnp.float32) + b3_ref[...]
        h = _relu_to_bf16(h)

        h = jnp.dot(h, w4_ref[...],
                    preferred_element_type=jnp.float32) + b4_ref[...]
        h = _relu_to_bf16(h)

        q = jnp.dot(h, w5_ref[...],
                    preferred_element_type=jnp.float32) + b5_ref[...]
        out_ref[...] = q  # (TB, 128) lane-dense f32, unmasked stores

    return mlp_kernel


def prepare_params(params):
    """One-time weight prep (hoisted out of the forward path).

    params = [(w1, b1), ..., (w5, b5)] with w_i shaped (in, out), b_i shaped (1, out).
    Returns (flat_weights_tuple, action_size) ready to feed to neural_network_forward.
    """
    (w1, b1), (w2, b2), (w3, b3), (w4, b4), (w5, b5) = params
    action_size = w5.shape[1]
    h4 = w4.shape[1]

    # Lane-dense layer 4: pad its output width (and layer 5's input rows) to 128.
    w4p = jnp.zeros((w4.shape[0], H4_PAD), jnp.float32).at[:, :h4].set(w4)
    b4p = jnp.zeros((1, H4_PAD), jnp.float32).at[:, :h4].set(b4)
    # Lane-dense final layer: pad out_features -> OUT_PAD (and rows -> H4_PAD).
    w5p = jnp.zeros((H4_PAD, OUT_PAD), jnp.float32).at[:h4, :action_size].set(w5)
    b5p = jnp.zeros((1, OUT_PAD), jnp.float32).at[:, :action_size].set(b5)

    flat = (
        w1.astype(jnp.float32), b1.astype(jnp.float32),   # layer 1 stays f32
        w2.astype(jnp.bfloat16), b2.astype(jnp.float32),
        w3.astype(jnp.bfloat16), b3.astype(jnp.float32),
        w4p.astype(jnp.bfloat16), b4p,
        w5p.astype(jnp.bfloat16), b5p,
    )
    return flat, action_size


def _pick_tb(batch):
    """Adaptive batch tile: big tiles to amortize grid-step overhead, but keep
    >=2 tiles on v7x so both TensorCores get work."""
    try:
        kind = jax.devices()[0].device_kind.lower()
    except Exception:  # pragma: no cover - defensive
        kind = ""
    min_tiles = 2 if "v7" in kind else 1
    tb = min(MAX_TB, _round_up(max(pl.cdiv(batch, min_tiles), 1), 8))
    return max(tb, 8)


def neural_network_forward(x, prepared, tb=None, slice_output=True):
    """prepared = prepare_params(params) output (reuse it across calls)."""
    flat, action_size = prepared
    batch, state_size = x.shape

    if tb is None:
        tb = _pick_tb(batch)

    grid_b = pl.cdiv(batch, tb)
    b_pad = grid_b * tb
    x = x.astype(jnp.float32)
    if b_pad != batch:
        x = jnp.zeros((b_pad, state_size), jnp.float32).at[:batch].set(x)

    # Weights/biases: whole arrays, constant block index -> resident across the grid.
    weight_specs = [pl.BlockSpec(a.shape, lambda i: (0, 0)) for a in flat]

    flops = 0
    for w in flat[0::2]:
        flops += 2 * b_pad * w.shape[0] * w.shape[1]
    bytes_accessed = (sum(int(a.size) * a.dtype.itemsize for a in flat)
                      + b_pad * state_size * 4 + b_pad * OUT_PAD * 4)

    try:
        kind = jax.devices()[0].device_kind.lower()
    except Exception:  # pragma: no cover - defensive
        kind = ""
    bf16_elementwise = ("v6" in kind) or ("v7" in kind)

    out = pl.pallas_call(
        make_mlp_kernel(bf16_elementwise),
        out_shape=jax.ShapeDtypeStruct((b_pad, OUT_PAD), jnp.float32),
        grid_spec=pltpu.PrefetchScalarGridSpec(
            num_scalar_prefetch=0,
            grid=(grid_b,),
            in_specs=[pl.BlockSpec((tb, state_size), lambda i: (i, 0))] + weight_specs,
            out_specs=pl.BlockSpec((tb, OUT_PAD), lambda i: (i, 0)),
        ),
        compiler_params=pltpu.CompilerParams(
            dimension_semantics=("parallel",)),   # v7x: batch tiles shard across 2 TCs
        cost_estimate=pl.CostEstimate(flops=flops, transcendentals=0,
                                      bytes_accessed=bytes_accessed),
    )(x, *flat)

    if slice_output:
        return out[:batch, :action_size]
    # Padded (b_pad, OUT_PAD) slab; columns >= action_size and rows >= batch are zero-ish
    # padding -- consumer indexes lazily (avoids an extra HBM copy at large batch).
    return out


def init_params(key, state_size, action_size):
    """Deterministic init mimicking nn.Linear default (uniform +/- 1/sqrt(fan_in))."""
    sizes = [(state_size, 256), (256, 128), (128, 128), (128, 64), (64, action_size)]
    params = []
    for (fan_in, fan_out) in sizes:
        key, kw, kb = jax.random.split(key, 3)
        bound = 1.0 / jnp.sqrt(float(fan_in))
        w = jax.random.uniform(kw, (fan_in, fan_out), jnp.float32, -bound, bound)
        b = jax.random.uniform(kb, (1, fan_out), jnp.float32, -bound, bound)
        params.append((w, b))
    return params


def reference_forward(x, params):
    h = x
    for i, (w, b) in enumerate(params):
        h = h @ w + b
        if i < len(params) - 1:
            h = jnp.maximum(h, 0.0)
    return h


if __name__ == "__main__":
    state_size = 16
    action_size = 4
    batch = 8

    key = jax.random.PRNGKey(0)
    key, kx = jax.random.split(key)
    x = jax.random.normal(kx, (batch, state_size), jnp.float32)

    params = init_params(key, state_size, action_size)

    # One-time weight preparation (padding + bf16 casts), reused across calls.
    prepared = prepare_params(params)
    prepared = (tuple(jax.block_until_ready(a) for a in prepared[0]), prepared[1])

    q_values = neural_network_forward(x, prepared)
    q_values = jax.block_until_ready(q_values)

    ref = reference_forward(x, params)
    assert q_values.shape == (batch, action_size)
    # Layer 1 runs in f32; layers 2-5 use bf16 MXU operands with f32 accumulation.
    assert jnp.allclose(q_values, ref, atol=5e-2, rtol=5e-2)

    print("KERNEL_OK")
</pallas_src>

<mosaic_0001>
module attributes {stable_mosaic.version = 11 : i64} {
  func.func @mlp_kernel(%arg0: i32, %arg1: memref<8x16xf32, #tpu.memory_space<vmem>>, %arg2: memref<16x256xf32, #tpu.memory_space<vmem>>, %arg3: memref<1x256xf32, #tpu.memory_space<vmem>>, %arg4: memref<256x128xbf16, #tpu.memory_space<vmem>>, %arg5: memref<1x128xf32, #tpu.memory_space<vmem>>, %arg6: memref<128x128xbf16, #tpu.memory_space<vmem>>, %arg7: memref<1x128xf32, #tpu.memory_space<vmem>>, %arg8: memref<128x128xbf16, #tpu.memory_space<vmem>>, %arg9: memref<1x128xf32, #tpu.memory_space<vmem>>, %arg10: memref<128x128xbf16, #tpu.memory_space<vmem>>, %arg11: memref<1x128xf32, #tpu.memory_space<vmem>>, %arg12: memref<8x128xf32, #tpu.memory_space<vmem>>) attributes {dimension_semantics = [#tpu.dimension_semantics<parallel>], iteration_bounds = array<i64: 1>, scalar_prefetch = 0 : i64, scratch_operands = 0 : i64, tpu.core_type = #tpu.core_type<tc>, window_params = [{transform_indices = @transform_0, window_bounds = array<i64: 8, 16>}, {pipeline_mode = #tpu.pipeline_mode<synchronous>, transform_indices = @transform_1, window_bounds = array<i64: 16, 256>}, {pipeline_mode = #tpu.pipeline_mode<synchronous>, transform_indices = @transform_2, window_bounds = array<i64: 1, 256>}, {pipeline_mode = #tpu.pipeline_mode<synchronous>, transform_indices = @transform_3, window_bounds = array<i64: 256, 128>}, {pipeline_mode = #tpu.pipeline_mode<synchronous>, transform_indices = @transform_4, window_bounds = array<i64: 1, 128>}, {pipeline_mode = #tpu.pipeline_mode<synchronous>, transform_indices = @transform_5, window_bounds = array<i64: 128, 128>}, {pipeline_mode = #tpu.pipeline_mode<synchronous>, transform_indices = @transform_6, window_bounds = array<i64: 1, 128>}, {pipeline_mode = #tpu.pipeline_mode<synchronous>, transform_indices = @transform_7, window_bounds = array<i64: 128, 128>}, {pipeline_mode = #tpu.pipeline_mode<synchronous>, transform_indices = @transform_8, window_bounds = array<i64: 1, 128>}, {pipeline_mode = #tpu.pipeline_mode<synchronous>, transform_indices = @transform_9, window_bounds = array<i64: 128, 128>}, {pipeline_mode = #tpu.pipeline_mode<synchronous>, transform_indices = @transform_10, window_bounds = array<i64: 1, 128>}, {transform_indices = @transform_11, window_bounds = array<i64: 8, 128>}]} {
    %c0 = arith.constant 0 : index
    %c0_0 = arith.constant 0 : index
    %0 = vector.load %arg1[%c0, %c0_0] : memref<8x16xf32, #tpu.memory_space<vmem>>, vector<8x16xf32>
    %c0_1 = arith.constant 0 : index
    %c0_2 = arith.constant 0 : index
    %1 = vector.load %arg2[%c0_1, %c0_2] : memref<16x256xf32, #tpu.memory_space<vmem>>, vector<16x256xf32>
    %cst = arith.constant dense<0.000000e+00> : vector<8x256xf32>
    %2 = tpu.matmul %0, %1, %cst {dimension_numbers = #tpu.dot_dimension_numbers<[1], [0], [0], [1], [0, 0, 1, 1], [], []>} : vector<8x16xf32>, vector<16x256xf32>, vector<8x256xf32> -> vector<8x256xf32>
    %c0_3 = arith.constant 0 : index
    %c0_4 = arith.constant 0 : index
    %3 = vector.load %arg3[%c0_3, %c0_4] : memref<1x256xf32, #tpu.memory_space<vmem>>, vector<1x256xf32>
    %4 = vector.broadcast %3 : vector<1x256xf32> to vector<8x256xf32>
    %5 = arith.addf %2, %4 : vector<8x256xf32>
    %cst_5 = arith.constant 0.000000e+00 : f32
    %6 = vector.broadcast %cst_5 : f32 to vector<8x256xf32>
    %7 = arith.maximumf %5, %6 : vector<8x256xf32>
    %8 = arith.truncf %7 : vector<8x256xf32> to vector<8x256xbf16>
    %c0_6 = arith.constant 0 : index
    %c0_7 = arith.constant 0 : index
    %9 = vector.load %arg4[%c0_6, %c0_7] : memref<256x128xbf16, #tpu.memory_space<vmem>>, vector<256x128xbf16>
    %cst_8 = arith.constant dense<0.000000e+00> : vector<8x128xf32>
    %10 = tpu.matmul %8, %9, %cst_8 {dimension_numbers = #tpu.dot_dimension_numbers<[1], [0], [0], [1], [0, 0, 1, 1], [], []>} : vector<8x256xbf16>, vector<256x128xbf16>, vector<8x128xf32> -> vector<8x128xf32>
    %c0_9 = arith.constant 0 : index
    %c0_10 = arith.constant 0 : index
    %11 = vector.load %arg5[%c0_9, %c0_10] : memref<1x128xf32, #tpu.memory_space<vmem>>, vector<1x128xf32>
    %12 = vector.broadcast %11 : vector<1x128xf32> to vector<8x128xf32>
    %13 = arith.addf %10, %12 : vector<8x128xf32>
    %cst_11 = arith.constant 0.000000e+00 : f32
    %14 = vector.broadcast %cst_11 : f32 to vector<8x128xf32>
    %15 = arith.maximumf %13, %14 : vector<8x128xf32>
    %16 = arith.truncf %15 : vector<8x128xf32> to vector<8x128xbf16>
    %c0_12 = arith.constant 0 : index
    %c0_13 = arith.constant 0 : index
    %17 = vector.load %arg6[%c0_12, %c0_13] : memref<128x128xbf16, #tpu.memory_space<vmem>>, vector<128x128xbf16>
    %cst_14 = arith.constant dense<0.000000e+00> : vector<8x128xf32>
    %18 = tpu.matmul %16, %17, %cst_14 {dimension_numbers = #tpu.dot_dimension_numbers<[1], [0], [0], [1], [0, 0, 1, 1], [], []>} : vector<8x128xbf16>, vector<128x128xbf16>, vector<8x128xf32> -> vector<8x128xf32>
    %c0_15 = arith.constant 0 : index
    %c0_16 = arith.constant 0 : index
    %19 = vector.load %arg7[%c0_15, %c0_16] : memref<1x128xf32, #tpu.memory_space<vmem>>, vector<1x128xf32>
    %20 = vector.broadcast %19 : vector<1x128xf32> to vector<8x128xf32>
    %21 = arith.addf %18, %20 : vector<8x128xf32>
    %cst_17 = arith.constant 0.000000e+00 : f32
    %22 = vector.broadcast %cst_17 : f32 to vector<8x128xf32>
    %23 = arith.maximumf %21, %22 : vector<8x128xf32>
    %24 = arith.truncf %23 : vector<8x128xf32> to vector<8x128xbf16>
    %c0_18 = arith.constant 0 : index
    %c0_19 = arith.constant 0 : index
    %25 = vector.load %arg8[%c0_18, %c0_19] : memref<128x128xbf16, #tpu.memory_space<vmem>>, vector<128x128xbf16>
    %cst_20 = arith.constant dense<0.000000e+00> : vector<8x128xf32>
    %26 = tpu.matmul %24, %25, %cst_20 {dimension_numbers = #tpu.dot_dimension_numbers<[1], [0], [0], [1], [0, 0, 1, 1], [], []>} : vector<8x128xbf16>, vector<128x128xbf16>, vector<8x128xf32> -> vector<8x128xf32>
    %c0_21 = arith.constant 0 : index
    %c0_22 = arith.constant 0 : index
    %27 = vector.load %arg9[%c0_21, %c0_22] : memref<1x128xf32, #tpu.memory_space<vmem>>, vector<1x128xf32>
    %28 = vector.broadcast %27 : vector<1x128xf32> to vector<8x128xf32>
    %29 = arith.addf %26, %28 : vector<8x128xf32>
    %cst_23 = arith.constant 0.000000e+00 : f32
    %30 = vector.broadcast %cst_23 : f32 to vector<8x128xf32>
    %31 = arith.maximumf %29, %30 : vector<8x128xf32>
    %32 = arith.truncf %31 : vector<8x128xf32> to vector<8x128xbf16>
    %c0_24 = arith.constant 0 : index
    %c0_25 = arith.constant 0 : index
    %33 = vector.load %arg10[%c0_24, %c0_25] : memref<128x128xbf16, #tpu.memory_space<vmem>>, vector<128x128xbf16>
    %cst_26 = arith.constant dense<0.000000e+00> : vector<8x128xf32>
    %34 = tpu.matmul %32, %33, %cst_26 {dimension_numbers = #tpu.dot_dimension_numbers<[1], [0], [0], [1], [0, 0, 1, 1], [], []>} : vector<8x128xbf16>, vector<128x128xbf16>, vector<8x128xf32> -> vector<8x128xf32>
    %c0_27 = arith.constant 0 : index
    %c0_28 = arith.constant 0 : index
    %35 = vector.load %arg11[%c0_27, %c0_28] : memref<1x128xf32, #tpu.memory_space<vmem>>, vector<1x128xf32>
    %36 = vector.broadcast %35 : vector<1x128xf32> to vector<8x128xf32>
    %37 = arith.addf %34, %36 : vector<8x128xf32>
    %c0_29 = arith.constant 0 : index
    %c0_30 = arith.constant 0 : index
    %38 = vector.load %arg12[%c0_29, %c0_30] : memref<8x128xf32, #tpu.memory_space<vmem>>, vector<8x128xf32>
    tpu.vector_store %arg12[%c0_29, %c0_30], %37 {strides = array<i32>} : memref<8x128xf32, #tpu.memory_space<vmem>>, vector<8x128xf32>,
    return
  }
  func.func @transform_0(%arg0: i32) -> (i32, i32) {
    %c0_i32 = arith.constant 0 : i32
    %c0_i32_0 = arith.constant 0 : i32
    return %arg0, %c0_i32 : i32, i32
  }
  func.func @transform_1(%arg0: i32) -> (i32, i32) {
    %c0_i32 = arith.constant 0 : i32
    %c0_i32_0 = arith.constant 0 : i32
    %c0_i32_1 = arith.constant 0 : i32
    return %c0_i32, %c0_i32_0 : i32, i32
  }
  func.func @transform_2(%arg0: i32) -> (i32, i32) {
    %c0_i32 = arith.constant 0 : i32
    %c0_i32_0 = arith.constant 0 : i32
    %c0_i32_1 = arith.constant 0 : i32
    return %c0_i32, %c0_i32_0 : i32, i32
  }
  func.func @transform_3(%arg0: i32) -> (i32, i32) {
    %c0_i32 = arith.constant 0 : i32
    %c0_i32_0 = arith.constant 0 : i32
    %c0_i32_1 = arith.constant 0 : i32
    return %c0_i32, %c0_i32_0 : i32, i32
  }
  func.func @transform_4(%arg0: i32) -> (i32, i32) {
    %c0_i32 = arith.constant 0 : i32
    %c0_i32_0 = arith.constant 0 : i32
    %c0_i32_1 = arith.constant 0 : i32
    return %c0_i32, %c0_i32_0 : i32, i32
  }
  func.func @transform_5(%arg0: i32) -> (i32, i32) {
    %c0_i32 = arith.constant 0 : i32
    %c0_i32_0 = arith.constant 0 : i32
    %c0_i32_1 = arith.constant 0 : i32
    return %c0_i32, %c0_i32_0 : i32, i32
  }
  func.func @transform_6(%arg0: i32) -> (i32, i32) {
    %c0_i32 = arith.constant 0 : i32
    %c0_i32_0 = arith.constant 0 : i32
    %c0_i32_1 = arith.constant 0 : i32
    return %c0_i32, %c0_i32_0 : i32, i32
  }
  func.func @transform_7(%arg0: i32) -> (i32, i32) {
    %c0_i32 = arith.constant 0 : i32
    %c0_i32_0 = arith.constant 0 : i32
    %c0_i32_1 = arith.constant 0 : i32
    return %c0_i32, %c0_i32_0 : i32, i32
  }
  func.func @transform_8(%arg0: i32) -> (i32, i32) {
    %c0_i32 = arith.constant 0 : i32
    %c0_i32_0 = arith.constant 0 : i32
    %c0_i32_1 = arith.constant 0 : i32
    return %c0_i32, %c0_i32_0 : i32, i32
  }
  func.func @transform_9(%arg0: i32) -> (i32, i32) {
    %c0_i32 = arith.constant 0 : i32
    %c0_i32_0 = arith.constant 0 : i32
    %c0_i32_1 = arith.constant 0 : i32
    return %c0_i32, %c0_i32_0 : i32, i32
  }
  func.func @transform_10(%arg0: i32) -> (i32, i32) {
    %c0_i32 = arith.constant 0 : i32
    %c0_i32_0 = arith.constant 0 : i32
    %c0_i32_1 = arith.constant 0 : i32
    return %c0_i32, %c0_i32_0 : i32, i32
  }
  func.func @transform_11(%arg0: i32) -> (i32, i32) {
    %c0_i32 = arith.constant 0 : i32
    %c0_i32_0 = arith.constant 0 : i32
    return %arg0, %c0_i32 : i32, i32
  }
}

</mosaic_0001>

<llo_original>
// kernel: tpu_custom_call.1
$region0: #{tpu_custom_call.1}
  #allocation0 [shape = 'u32[]', space=smem, size = 0x4, offset = 0x4, fixed_abs, tag = 'smem constant byte address 0x4 - core index']
  #allocation1 [shape = 'u32[144,128]{1,0:T(1,128)}', space=vmem, size = 0x12000, scoped, tag = 'internal scratch']
  %s0 = inlined_call_operand.hbm [shape: f32[8,16], index: 0, kind: input, shape index: {}]
  %s1 = inlined_call_operand.hbm [shape: f32[16,256], index: 1, kind: input, shape index: {}]
  %s2 = inlined_call_operand.vmem [shape: f32[1,256], index: 2, kind: input, shape index: {}]
  %s3 = inlined_call_operand.hbm [shape: bf16[256,128], index: 3, kind: input, shape index: {}]
  %s4 = inlined_call_operand.vmem [shape: f32[1,128], index: 4, kind: input, shape index: {}]
  %s5 = inlined_call_operand.hbm [shape: bf16[128,128], index: 5, kind: input, shape index: {}]
  %s6 = inlined_call_operand.vmem [shape: f32[1,128], index: 6, kind: input, shape index: {}]
  %s7 = inlined_call_operand.hbm [shape: bf16[128,128], index: 7, kind: input, shape index: {}]
  %s8 = inlined_call_operand.vmem [shape: f32[1,128], index: 8, kind: input, shape index: {}]
  %s9 = inlined_call_operand.hbm [shape: bf16[128,128], index: 9, kind: input, shape index: {}]
  %s10 = inlined_call_operand.vmem [shape: f32[1,128], index: 10, kind: input, shape index: {}]
  %s11 = inlined_call_operand.hbm [shape: f32[8,128], index: 11, kind: output, shape index: {}]
  %s12 = sld [smem:[#allocation0]]
  $region78: #{tpu_custom_call.1} parent=0
    _
  %s14 = ssub.s32 1, %s12
  %s15 = scalar_select 0, %s14, %s12
  $region1: #{tpu_custom_call.1} parent=0
    #allocation2 [shape = 'u8[4096]{0}', space=vmem, size = 0x1000, scoped, tag = 'input window, operand 0, single buffered']
    #allocation3 [shape = 's32[1]{0}', space=sflag, size = 0x4, scoped, tag = 'scoped memory for tpu_custom_call.1']
    #allocation4 [shape = 's32[1]{0}', space=sflag, size = 0x4, scoped, tag = 'scoped memory for tpu_custom_call.1']
    #allocation5 [shape = 'u8[16384]{0}', space=vmem, size = 0x4000, scoped, tag = 'input window, operand 1, single buffered']
    #allocation6 [shape = 's32[1]{0}', space=sflag, size = 0x4, scoped, tag = 'scoped memory for tpu_custom_call.1']
    #allocation7 [shape = 'u8[65536]{0}', space=vmem, size = 0x10000, scoped, tag = 'input window, operand 3, single buffered']
    #allocation8 [shape = 'u8[32768]{0}', space=vmem, size = 0x8000, scoped, tag = 'input window, operand 5, single buffered']
    #allocation9 [shape = 's32[1]{0}', space=sflag, size = 0x4, scoped, tag = 'scoped memory for tpu_custom_call.1']
    #allocation10 [shape = 'u8[32768]{0}', space=vmem, size = 0x8000, scoped, tag = 'input window, operand 7, single buffered']
    #allocation11 [shape = 'u8[32768]{0}', space=vmem, size = 0x8000, scoped, tag = 'input window, operand 9, single buffered']
    #allocation12 [shape = 's32[1]{0}', space=sflag, size = 0x4, scoped, tag = 'scoped memory for tpu_custom_call.1']
    #allocation13 [shape = 'u8[4096]{0}', space=vmem, size = 0x1000, scoped, tag = 'output window, operand 0, single buffered']
    %16 = vsyncpa [#allocation3], 0
    %17 = vsyncpa [#allocation6], 0
    %18 = vsyncpa [#allocation9], 0
    %19 = vsyncpa [#allocation12], 0
    %20 = vsyncpa [#allocation4], 0
    // Predicated region
    $region2: #{tpu_custom_call.1} parent=1 // pred_check
      _
    $region3: #{tpu_custom_call.1} parent=1 // pred_check_branch
      %22 = sbr.rel (0) target = $region5
    $region4: #{tpu_custom_call.1} parent=1 // pred_region
      %s24 = ssub.s32 128, 128
      %25 = vsyncadd [#allocation3], %s24
      %s27 = sshll.u32 [#allocation2], 4
      %s28 = int_to_ptr.vmem [resolvable:$true] %s27
      %30 = dma.hbm_to_vmem [thread:$0]  %s0, 128, %s28, [#allocation3]
    $region5: #{tpu_custom_call.1} parent=1 // pred_fallthru
      _
    // Predicated region
    $region6: #{tpu_custom_call.1} parent=1 // pred_check
      _
    $region7: #{tpu_custom_call.1} parent=1 // pred_check_branch
      %32 = sbr.rel (0) target = $region9
    $region8: #{tpu_custom_call.1} parent=1 // pred_region
      %s34 = ssub.s32 512, 512
      %35 = vsyncadd [#allocation6], %s34
      %s36 = sshll.u32 [#allocation5], 4
      %s37 = int_to_ptr.vmem [resolvable:$true] %s36
      %42 = dma.hbm_to_vmem [thread:$0]  %s1, 512, %s37, [#allocation6], 256, 256, 16
    $region9: #{tpu_custom_call.1} parent=1 // pred_fallthru
      _
    // Predicated region
    $region10: #{tpu_custom_call.1} parent=1 // pred_check
      _
    $region11: #{tpu_custom_call.1} parent=1 // pred_check_branch
      %44 = sbr.rel (0) target = $region13
    $region12: #{tpu_custom_call.1} parent=1 // pred_region
      _
    $region13: #{tpu_custom_call.1} parent=1 // pred_fallthru
      _
    // Predicated region
    $region14: #{tpu_custom_call.1} parent=1 // pred_check
      _
    $region15: #{tpu_custom_call.1} parent=1 // pred_check_branch
      %46 = sbr.rel (0) target = $region17
    $region16: #{tpu_custom_call.1} parent=1 // pred_region
      %s48 = ssub.s32 2048, 2048
      %49 = vsyncadd [#allocation6], %s48
      %s50 = sshll.u32 [#allocation7], 4
      %s51 = int_to_ptr.vmem [resolvable:$true] %s50
      %56 = dma.hbm_to_vmem [thread:$0]  %s3, 2048, %s51, [#allocation6], 64, 64, 4
    $region17: #{tpu_custom_call.1} parent=1 // pred_fallthru
      _
    // Predicated region
    $region18: #{tpu_custom_call.1} parent=1 // pred_check
      _
    $region19: #{tpu_custom_call.1} parent=1 // pred_check_branch
      %58 = sbr.rel (0) target = $region21
    $region20: #{tpu_custom_call.1} parent=1 // pred_region
      _
    $region21: #{tpu_custom_call.1} parent=1 // pred_fallthru
      _
    // Predicated region
    $region22: #{tpu_custom_call.1} parent=1 // pred_check
      _
    $region23: #{tpu_custom_call.1} parent=1 // pred_check_branch
      %60 = sbr.rel (0) target = $region25
    $region24: #{tpu_custom_call.1} parent=1 // pred_region
      %s62 = ssub.s32 1024, 1024
      %63 = vsyncadd [#allocation9], %s62
      %s64 = sshll.u32 [#allocation8], 4
      %s65 = int_to_ptr.vmem [resolvable:$true] %s64
      %70 = dma.hbm_to_vmem [thread:$0]  %s5, 1024, %s65, [#allocation9], 64, 64, 4
    $region25: #{tpu_custom_call.1} parent=1 // pred_fallthru
      _
    // Predicated region
    $region26: #{tpu_custom_call.1} parent=1 // pred_check
      _
    $region27: #{tpu_custom_call.1} parent=1 // pred_check_branch
      %72 = sbr.rel (0) target = $region29
    $region28: #{tpu_custom_call.1} parent=1 // pred_region
      _
    $region29: #{tpu_custom_call.1} parent=1 // pred_fallthru
      _
    // Predicated region
    $region30: #{tpu_custom_call.1} parent=1 // pred_check
      _
    $region31: #{tpu_custom_call.1} parent=1 // pred_check_branch
      %74 = sbr.rel (0) target = $region33
    $region32: #{tpu_custom_call.1} parent=1 // pred_region
      %s76 = ssub.s32 1024, 1024
      %77 = vsyncadd [#allocation9], %s76
      %s78 = sshll.u32 [#allocation10], 4
      %s79 = int_to_ptr.vmem [resolvable:$true] %s78
      %84 = dma.hbm_to_vmem [thread:$0]  %s7, 1024, %s79, [#allocation9], 64, 64, 4
    $region33: #{tpu_custom_call.1} parent=1 // pred_fallthru
      _
    // Predicated region
    $region34: #{tpu_custom_call.1} parent=1 // pred_check
      _
    $region35: #{tpu_custom_call.1} parent=1 // pred_check_branch
      %86 = sbr.rel (0) target = $region37
    $region36: #{tpu_custom_call.1} parent=1 // pred_region
      _
    $region37: #{tpu_custom_call.1} parent=1 // pred_fallthru
      _
    // Predicated region
    $region38: #{tpu_custom_call.1} parent=1 // pred_check
      _
    $region39: #{tpu_custom_call.1} parent=1 // pred_check_branch
      %88 = sbr.rel (0) target = $region41
    $region40: #{tpu_custom_call.1} parent=1 // pred_region
      %s90 = ssub.s32 1024, 1024
      %91 = vsyncadd [#allocation12], %s90
      %s92 = sshll.u32 [#allocation11], 4
      %s93 = int_to_ptr.vmem [resolvable:$true] %s92
      %98 = dma.hbm_to_vmem [thread:$0]  %s9, 1024, %s93, [#allocation12], 64, 64, 4
    $region41: #{tpu_custom_call.1} parent=1 // pred_fallthru
      _
    // Predicated region
    $region42: #{tpu_custom_call.1} parent=1 // pred_check
      _
    $region43: #{tpu_custom_call.1} parent=1 // pred_check_branch
      %100 = sbr.rel (0) target = $region45
    $region44: #{tpu_custom_call.1} parent=1 // pred_region
      _
    $region45: #{tpu_custom_call.1} parent=1 // pred_fallthru
      _
    // Predicated region
    $region46: #{tpu_custom_call.1} parent=1 // pred_check
      _
    $region47: #{tpu_custom_call.1} parent=1 // pred_check_branch
      %102 = sbr.rel (0) target = $region49
    $region48: #{tpu_custom_call.1} parent=1 // pred_region
      %103 = dma.done [#allocation3], 128
    $region49: #{tpu_custom_call.1} parent=1 // pred_fallthru
      _
    // Predicated region
    $region50: #{tpu_custom_call.1} parent=1 // pred_check
      _
    $region51: #{tpu_custom_call.1} parent=1 // pred_check_branch
      %105 = sbr.rel (0) target = $region53
    $region52: #{tpu_custom_call.1} parent=1 // pred_region
      %106 = dma.done [#allocation6], 512
    $region53: #{tpu_custom_call.1} parent=1 // pred_fallthru
      _
    // Predicated region
    $region54: #{tpu_custom_call.1} parent=1 // pred_check
      _
    $region55: #{tpu_custom_call.1} parent=1 // pred_check_branch
      %108 = sbr.rel (0) target = $region57
    $region56: #{tpu_custom_call.1} parent=1 // pred_region
      %109 = dma.done [#allocation6], 2048
    $region57: #{tpu_custom_call.1} parent=1 // pred_fallthru
      _
    // Predicated region
    $region58: #{tpu_custom_call.1} parent=1 // pred_check
      _
    $region59: #{tpu_custom_call.1} parent=1 // pred_check_branch
      %111 = sbr.rel (0) target = $region61
    $region60: #{tpu_custom_call.1} parent=1 // pred_region
      %112 = dma.done [#allocation9], 1024
    $region61: #{tpu_custom_call.1} parent=1 // pred_fallthru
      _
    // Predicated region
    $region62: #{tpu_custom_call.1} parent=1 // pred_check
      _
    $region63: #{tpu_custom_call.1} parent=1 // pred_check_branch
      %114 = sbr.rel (0) target = $region65
    $region64: #{tpu_custom_call.1} parent=1 // pred_region
      %115 = dma.done [#allocation9], 1024
    $region65: #{tpu_custom_call.1} parent=1 // pred_fallthru
      _
    // Predicated region
    $region66: #{tpu_custom_call.1} parent=1 // pred_check
      _
    $region67: #{tpu_custom_call.1} parent=1 // pred_check_branch
      %117 = sbr.rel (0) target = $region69
    $region68: #{tpu_custom_call.1} parent=1 // pred_region
      %118 = dma.done [#allocation12], 1024
    $region69: #{tpu_custom_call.1} parent=1 // pred_fallthru
      _
    %v120 = vld [vmem:[#allocation2] sm:$0xff]
    %v121 = vld [vmem:[#allocation5] sm:$0xff]
    %v122 = vld [vmem:[#allocation5 + $0x8] sm:$0xff]
    %v123 = vld [vmem:[#allocation5 + $0x10] sm:$0xff]
    %v124 = vld [vmem:[#allocation5 + $0x18] sm:$0xff]
    %v125 = vld [vmem:[%s2] sm:$0x3]
    %v127 = vlaneseq
    %v128 = vshrl.u32 %v127, 7
    %v129 = vsub.s32 0, %v128
    %v130 = vrot.slane %v125, %v129
    %v131 = vlaneseq
    %v132 = vshrl.u32 %v131, 7
    %v133 = vsub.s32 1, %v132
    %v134 = vrot.slane %v125, %v133
    %vm137 = vcmask 130048
    %v139 = vsel %vm137, %v120, 0
    %141 = vmatprep.subr.mxu0 0.0
    %142 = vmatpush1.msra.mxu0 0.0
    %143 = vmatprep.subr.mxu0 0.0
    %144 = vmatpush1.msra.mxu0 0.0
    %145 = vmatprep.subr.mxu0 0.0
    %146 = vmatpush1.msra.mxu0 0.0
    %147 = vmatprep.subr.mxu0 0.0
    %148 = vmatpush1.msra.mxu0 0.0
    %149 = vmatprep.subr.mxu0 0.0
    %150 = vmatpush1.msra.mxu0 0.0
    %151 = vmatprep.subr.mxu0 0.0
    %152 = vmatpush1.msra.mxu0 0.0
    %153 = vmatprep.subr.mxu0 0.0
    %154 = vmatpush1.msra.mxu0 0.0
    %155 = vmatprep.subr.mxu0 0.0
    %156 = vmatpush1.msra.mxu0 0.0
    %157 = vmatprep.subr.mxu0 0.0
    %158 = vmatpush1.msra.mxu0 0.0
    %159 = vmatprep.subr.mxu0 0.0
    %160 = vmatpush1.msra.mxu0 0.0
    %161 = vmatprep.subr.mxu0 0.0
    %162 = vmatpush1.msra.mxu0 0.0
    %163 = vmatprep.subr.mxu0 0.0
    %164 = vmatpush1.msra.mxu0 0.0
    %165 = vmatprep.subr.mxu0 0.0
    %166 = vmatpush1.msra.mxu0 0.0
    %167 = vmatprep.subr.mxu0 0.0
    %168 = vmatpush1.msra.mxu0 0.0
    %169 = vmatprep.subr.mxu0 %v124
    %170 = vmatpush1.msra.mxu0 %v123
    %171 = vmatprep.subr.mxu0 %v122
    %172 = vmatpush1.msra.mxu0 %v121
    %173 = vmatprep.subr.mxu0 0.0
    %174 = vmatpush2.msra.mxu0 0.0
    %175 = vmatprep.subr.mxu0 0.0
    %176 = vmatpush2.msra.mxu0 0.0
    %177 = vmatprep.subr.mxu0 0.0
    %178 = vmatpush2.msra.mxu0 0.0
    %179 = vmatprep.subr.mxu0 0.0
    %180 = vmatpush2.msra.mxu0 0.0
    %181 = vmatprep.subr.mxu0 0.0
    %182 = vmatpush2.msra.mxu0 0.0
    %183 = vmatprep.subr.mxu0 0.0
    %184 = vmatpush2.msra.mxu0 0.0
    %185 = vmatprep.subr.mxu0 0.0
    %186 = vmatpush2.msra.mxu0 0.0
    %187 = vmatprep.subr.mxu0 0.0
    %188 = vmatpush2.msra.mxu0 0.0
    %189 = vmatprep.subr.mxu0 0.0
    %190 = vmatpush2.msra.mxu0 0.0
    %191 = vmatprep.subr.mxu0 0.0
    %192 = vmatpush2.msra.mxu0 0.0
    %193 = vmatprep.subr.mxu0 0.0
    %194 = vmatpush2.msra.mxu0 0.0
    %195 = vmatprep.subr.mxu0 0.0
    %196 = vmatpush2.msra.mxu0 0.0
    %197 = vmatprep.subr.mxu0 0.0
    %198 = vmatpush2.msra.mxu0 0.0
    %199 = vmatprep.subr.mxu0 0.0
    %200 = vmatpush2.msra.mxu0 0.0
    %201 = vmatprep.subr.mxu0 0.0
    %202 = vmatpush2.msra.mxu0 0.0
    %203 = vmatprep.subr.mxu0 0.0
    %204 = vmatpush2.msra.mxu0 0.0
    %205 = vmatprep.mubr.f32.mxu0 0.0
    %206 = vmatmul.mubr.f32.gmra.mxu0 %v139
    %v207 = vpop.f32.mrf.mxu0
    %v208 = vadd.f32 %v130, %v207
    %v209 = vpop.f32.mrf.mxu0
    %v210 = vadd.f32 %v134, %v209
    %211 = vdwg.mxu0
    %v212 = vmax.f32 %v208, 0.0
    %v213 = vmax.f32 %v210, 0.0
    %v214 = vpack.c.bf16 %v212, %v212
    %v215 = vpack.c.bf16 %v213, %v213
    %v216 = vld [vmem:[#allocation7] sm:$0xf]
    %v217 = vld [vmem:[#allocation7 + $0x4] sm:$0xf]
    %v218 = vld [vmem:[#allocation7 + $0x8] sm:$0xf]
    %v219 = vld [vmem:[#allocation7 + $0xc] sm:$0xf]
    %v220 = vld [vmem:[#allocation7 + $0x10] sm:$0xf]
    %v221 = vld [vmem:[#allocation7 + $0x14] sm:$0xf]
    %v222 = vld [vmem:[#allocation7 + $0x18] sm:$0xf]
    %v223 = vld [vmem:[#allocation7 + $0x1c] sm:$0xf]
    %v224 = vld [vmem:[#allocation7 + $0x20] sm:$0xf]
    %v225 = vld [vmem:[#allocation7 + $0x24] sm:$0xf]
    %v226 = vld [vmem:[#allocation7 + $0x28] sm:$0xf]
    %v227 = vld [vmem:[#allocation7 + $0x2c] sm:$0xf]
    %v228 = vld [vmem:[#allocation7 + $0x30] sm:$0xf]
    %v229 = vld [vmem:[#allocation7 + $0x34] sm:$0xf]
    %v230 = vld [vmem:[#allocation7 + $0x38] sm:$0xf]
    %v231 = vld [vmem:[#allocation7 + $0x3c] sm:$0xf]
    %v232 = vld [vmem:[#allocation7 + $0x40] sm:$0xf]
    %v233 = vld [vmem:[#allocation7 + $0x44] sm:$0xf]
    %v234 = vld [vmem:[#allocation7 + $0x48] sm:$0xf]
    %v235 = vld [vmem:[#allocation7 + $0x4c] sm:$0xf]
    %v236 = vld [vmem:[#allocation7 + $0x50] sm:$0xf]
    %v237 = vld [vmem:[#allocation7 + $0x54] sm:$0xf]
    %v238 = vld [vmem:[#allocation7 + $0x58] sm:$0xf]
    %v239 = vld [vmem:[#allocation7 + $0x5c] sm:$0xf]
    %v240 = vld [vmem:[#allocation7 + $0x60] sm:$0xf]
    %v241 = vld [vmem:[#allocation7 + $0x64] sm:$0xf]
    %v242 = vld [vmem:[#allocation7 + $0x68] sm:$0xf]
    %v243 = vld [vmem:[#allocation7 + $0x6c] sm:$0xf]
    %v244 = vld [vmem:[#allocation7 + $0x70] sm:$0xf]
    %v245 = vld [vmem:[#allocation7 + $0x74] sm:$0xf]
    %v246 = vld [vmem:[#allocation7 + $0x78] sm:$0xf]
    %v247 = vld [vmem:[#allocation7 + $0x7c] sm:$0xf]
    %v248 = vld [vmem:[%s4] sm:$0x1]
    %v250 = vlaneseq
    %v251 = vshrl.u32 %v250, 7
    %v252 = vsub.s32 0, %v251
    %v253 = vrot.slane %v248, %v252
    %v287 = vunpack.c.l.b16 %v216
    %v288 = vunpack.c.l.b16 %v217
    %v289 = vunpack.c.l.b16 %v218
    %v290 = vunpack.c.l.b16 %v219
    %v291 = vunpack.c.l.b16 %v220
    %v292 = vunpack.c.l.b16 %v221
    %v293 = vunpack.c.l.b16 %v222
    %v294 = vunpack.c.l.b16 %v223
    %v295 = vunpack.c.l.b16 %v224
    %v296 = vunpack.c.l.b16 %v225
    %v297 = vunpack.c.l.b16 %v226
    %v298 = vunpack.c.l.b16 %v227
    %v299 = vunpack.c.l.b16 %v228
    %v300 = vunpack.c.l.b16 %v229
    %v301 = vunpack.c.l.b16 %v230
    %v302 = vunpack.c.l.b16 %v231
    %v303 = vunpack.c.l.b16 %v232
    %v304 = vunpack.c.l.b16 %v233
    %v305 = vunpack.c.l.b16 %v234
    %v306 = vunpack.c.l.b16 %v235
    %v307 = vunpack.c.l.b16 %v236
    %v308 = vunpack.c.l.b16 %v237
    %v309 = vunpack.c.l.b16 %v238
    %v310 = vunpack.c.l.b16 %v239
    %v311 = vunpack.c.l.b16 %v240
    %v312 = vunpack.c.l.b16 %v241
    %v313 = vunpack.c.l.b16 %v242
    %v314 = vunpack.c.l.b16 %v243
    %v315 = vunpack.c.l.b16 %v244
    %v316 = vunpack.c.l.b16 %v245
    %v317 = vunpack.c.l.b16 %v246
    %v318 = vunpack.c.l.b16 %v247
    %v319 = vpack.c.b16 %v288, %v287
    %v320 = vpack.c.b16 %v290, %v289
    %v321 = vpack.c.b16 %v292, %v291
    %v322 = vpack.c.b16 %v294, %v293
    %v323 = vpack.c.b16 %v296, %v295
    %v324 = vpack.c.b16 %v298, %v297
    %v325 = vpack.c.b16 %v300, %v299
    %v326 = vpack.c.b16 %v302, %v301
    %v327 = vpack.c.b16 %v304, %v303
    %v328 = vpack.c.b16 %v306, %v305
    %v329 = vpack.c.b16 %v308, %v307
    %v330 = vpack.c.b16 %v310, %v309
    %v331 = vpack.c.b16 %v312, %v311
    %v332 = vpack.c.b16 %v314, %v313
    %v333 = vpack.c.b16 %v316, %v315
    %v334 = vpack.c.b16 %v318, %v317
    %351 = vmatprep.subr.bf16.mxu0 0
    %352 = vmatpush1.bf16.msra.mxu0 %v326
    %353 = vmatprep.subr.bf16.mxu0 0
    %354 = vmatpush1.bf16.msra.mxu0 %v325
    %355 = vmatprep.subr.bf16.mxu0 0
    %356 = vmatpush1.bf16.msra.mxu0 %v324
    %357 = vmatprep.subr.bf16.mxu0 0
    %358 = vmatpush1.bf16.msra.mxu0 %v323
    %359 = vmatprep.subr.bf16.mxu0 0
    %360 = vmatpush1.bf16.msra.mxu0 %v322
    %361 = vmatprep.subr.bf16.mxu0 0
    %362 = vmatpush1.bf16.msra.mxu0 %v321
    %363 = vmatprep.subr.bf16.mxu0 0
    %364 = vmatpush1.bf16.msra.mxu0 %v320
    %365 = vmatprep.subr.bf16.mxu0 0
    %366 = vmatpush1.bf16.msra.mxu0 %v319
    %367 = vmatprep.subr.bf16.mxu0 0
    %368 = vmatpush2.bf16.msra.mxu0 %v334
    %369 = vmatprep.subr.bf16.mxu0 0
    %370 = vmatpush2.bf16.msra.mxu0 %v333
    %371 = vmatprep.subr.bf16.mxu0 0
    %372 = vmatpush2.bf16.msra.mxu0 %v332
    %373 = vmatprep.subr.bf16.mxu0 0
    %374 = vmatpush2.bf16.msra.mxu0 %v331
    %375 = vmatprep.subr.bf16.mxu0 0
    %376 = vmatpush2.bf16.msra.mxu0 %v330
    %377 = vmatprep.subr.bf16.mxu0 0
    %378 = vmatpush2.bf16.msra.mxu0 %v329
    %379 = vmatprep.subr.bf16.mxu0 0
    %380 = vmatpush2.bf16.msra.mxu0 %v328
    %381 = vmatprep.subr.bf16.mxu0 0
    %382 = vmatpush2.bf16.msra.mxu0 %v327
    %383 = vmatprep.mubr.bf16.mxu0 %v215
    %384 = vmatmul.mubr.bf16.gmra.mxu0 %v214
    %v385 = vpop.f32.mrf.mxu0
    %v386 = vadd.f32 %v253, %v385
    %v387 = vpop.f32.mrf.mxu0
    %v388 = vpop.f32.mrf.mxu0
    %v389 = vpop.f32.mrf.mxu0
    %390 = vdwg.mxu0
    %v391 = vmax.f32 %v386, 0.0
    %v392 = vpack.c.bf16 %v391, %v391
    %v393 = vld [vmem:[#allocation8] sm:$0xf]
    %v394 = vld [vmem:[#allocation8 + $0x4] sm:$0xf]
    %v395 = vld [vmem:[#allocation8 + $0x8] sm:$0xf]
    %v396 = vld [vmem:[#allocation8 + $0xc] sm:$0xf]
    %v397 = vld [vmem:[#allocation8 + $0x10] sm:$0xf]
    %v398 = vld [vmem:[#allocation8 + $0x14] sm:$0xf]
    %v399 = vld [vmem:[#allocation8 + $0x18] sm:$0xf]
    %v400 = vld [vmem:[#allocation8 + $0x1c] sm:$0xf]
    %v401 = vld [vmem:[#allocation8 + $0x20] sm:$0xf]
    %v402 = vld [vmem:[#allocation8 + $0x24] sm:$0xf]
    %v403 = vld [vmem:[#allocation8 + $0x28] sm:$0xf]
    %v404 = vld [vmem:[#allocation8 + $0x2c] sm:$0xf]
    %v405 = vld [vmem:[#allocation8 + $0x30] sm:$0xf]
    %v406 = vld [vmem:[#allocation8 + $0x34] sm:$0xf]
    %v407 = vld [vmem:[#allocation8 + $0x38] sm:$0xf]
    %v408 = vld [vmem:[#allocation8 + $0x3c] sm:$0xf]
    %v409 = vld [vmem:[%s6] sm:$0x1]
    %v411 = vlaneseq
    %v412 = vshrl.u32 %v411, 7
    %v413 = vsub.s32 0, %v412
    %v414 = vrot.slane %v409, %v413
    %v432 = vunpack.c.l.b16 %v393
    %v433 = vunpack.c.l.b16 %v394
    %v434 = vunpack.c.l.b16 %v395
    %v435 = vunpack.c.l.b16 %v396
    %v436 = vunpack.c.l.b16 %v397
    %v437 = vunpack.c.l.b16 %v398
    %v438 = vunpack.c.l.b16 %v399
    %v439 = vunpack.c.l.b16 %v400
    %v440 = vunpack.c.l.b16 %v401
    %v441 = vunpack.c.l.b16 %v402
    %v442 = vunpack.c.l.b16 %v403
    %v443 = vunpack.c.l.b16 %v404
    %v444 = vunpack.c.l.b16 %v405
    %v445 = vunpack.c.l.b16 %v406
    %v446 = vunpack.c.l.b16 %v407
    %v447 = vunpack.c.l.b16 %v408
    %v448 = vpack.c.b16 %v433, %v432
    %v449 = vpack.c.b16 %v435, %v434
    %v450 = vpack.c.b16 %v437, %v436
    %v451 = vpack.c.b16 %v439, %v438
    %v452 = vpack.c.b16 %v441, %v440
    %v453 = vpack.c.b16 %v443, %v442
    %v454 = vpack.c.b16 %v445, %v444
    %v455 = vpack.c.b16 %v447, %v446
    %464 = vmatprep.subr.bf16.mxu0 0
    %465 = vmatpush1.bf16.msra.mxu0 %v455
    %466 = vmatprep.subr.bf16.mxu0 0
    %467 = vmatpush1.bf16.msra.mxu0 %v454
    %468 = vmatprep.subr.bf16.mxu0 0
    %469 = vmatpush1.bf16.msra.mxu0 %v453
    %470 = vmatprep.subr.bf16.mxu0 0
    %471 = vmatpush1.bf16.msra.mxu0 %v452
    %472 = vmatprep.subr.bf16.mxu0 0
    %473 = vmatpush1.bf16.msra.mxu0 %v451
    %474 = vmatprep.subr.bf16.mxu0 0
    %475 = vmatpush1.bf16.msra.mxu0 %v450
    %476 = vmatprep.subr.bf16.mxu0 0
    %477 = vmatpush1.bf16.msra.mxu0 %v449
    %478 = vmatprep.subr.bf16.mxu0 0
    %479 = vmatpush1.bf16.msra.mxu0 %v448
    %480 = vmatprep.subr.bf16.mxu0 0
    %481 = vmatpush2.bf16.msra.mxu0 0
    %482 = vmatprep.subr.bf16.mxu0 0
    %483 = vmatpush2.bf16.msra.mxu0 0
    %484 = vmatprep.subr.bf16.mxu0 0
    %485 = vmatpush2.bf16.msra.mxu0 0
    %486 = vmatprep.subr.bf16.mxu0 0
    %487 = vmatpush2.bf16.msra.mxu0 0
    %488 = vmatprep.subr.bf16.mxu0 0
    %489 = vmatpush2.bf16.msra.mxu0 0
    %490 = vmatprep.subr.bf16.mxu0 0
    %491 = vmatpush2.bf16.msra.mxu0 0
    %492 = vmatprep.subr.bf16.mxu0 0
    %493 = vmatpush2.bf16.msra.mxu0 0
    %494 = vmatprep.subr.bf16.mxu0 0
    %495 = vmatpush2.bf16.msra.mxu0 0
    %496 = vmatprep.mubr.bf16.mxu0 0
    %497 = vmatmul.mubr.bf16.gmra.mxu0 %v392
    %v498 = vpop.f32.mrf.mxu0
    %v499 = vadd.f32 %v414, %v498
    %v500 = vpop.f32.mrf.mxu0
    %v501 = vpop.f32.mrf.mxu0
    %v502 = vpop.f32.mrf.mxu0
    %503 = vdwg.mxu0
    %v504 = vmax.f32 %v499, 0.0
    %v505 = vpack.c.bf16 %v504, %v504
    %v506 = vld [vmem:[#allocation10] sm:$0xf]
    %v507 = vld [vmem:[#allocation10 + $0x4] sm:$0xf]
    %v508 = vld [vmem:[#allocation10 + $0x8] sm:$0xf]
    %v509 = vld [vmem:[#allocation10 + $0xc] sm:$0xf]
    %v510 = vld [vmem:[#allocation10 + $0x10] sm:$0xf]
    %v511 = vld [vmem:[#allocation10 + $0x14] sm:$0xf]
    %v512 = vld [vmem:[#allocation10 + $0x18] sm:$0xf]
    %v513 = vld [vmem:[#allocation10 + $0x1c] sm:$0xf]
    %v514 = vld [vmem:[#allocation10 + $0x20] sm:$0xf]
    %v515 = vld [vmem:[#allocation10 + $0x24] sm:$0xf]
    %v516 = vld [vmem:[#allocation10 + $0x28] sm:$0xf]
    %v517 = vld [vmem:[#allocation10 + $0x2c] sm:$0xf]
    %v518 = vld [vmem:[#allocation10 + $0x30] sm:$0xf]
    %v519 = vld [vmem:[#allocation10 + $0x34] sm:$0xf]
    %v520 = vld [vmem:[#allocation10 + $0x38] sm:$0xf]
    %v521 = vld [vmem:[#allocation10 + $0x3c] sm:$0xf]
    %v522 = vld [vmem:[%s8] sm:$0x1]
    %v524 = vlaneseq
    %v525 = vshrl.u32 %v524, 7
    %v526 = vsub.s32 0, %v525
    %v527 = vrot.slane %v522, %v526
    %v545 = vunpack.c.l.b16 %v506
    %v546 = vunpack.c.l.b16 %v507
    %v547 = vunpack.c.l.b16 %v508
    %v548 = vunpack.c.l.b16 %v509
    %v549 = vunpack.c.l.b16 %v510
    %v550 = vunpack.c.l.b16 %v511
    %v551 = vunpack.c.l.b16 %v512
    %v552 = vunpack.c.l.b16 %v513
    %v553 = vunpack.c.l.b16 %v514
    %v554 = vunpack.c.l.b16 %v515
    %v555 = vunpack.c.l.b16 %v516
    %v556 = vunpack.c.l.b16 %v517
    %v557 = vunpack.c.l.b16 %v518
    %v558 = vunpack.c.l.b16 %v519
    %v559 = vunpack.c.l.b16 %v520
    %v560 = vunpack.c.l.b16 %v521
    %v561 = vpack.c.b16 %v546, %v545
    %v562 = vpack.c.b16 %v548, %v547
    %v563 = vpack.c.b16 %v550, %v549
    %v564 = vpack.c.b16 %v552, %v551
    %v565 = vpack.c.b16 %v554, %v553
    %v566 = vpack.c.b16 %v556, %v555
    %v567 = vpack.c.b16 %v558, %v557
    %v568 = vpack.c.b16 %v560, %v559
    %577 = vmatprep.subr.bf16.mxu0 0
    %578 = vmatpush1.bf16.msra.mxu0 %v568
    %579 = vmatprep.subr.bf16.mxu0 0
    %580 = vmatpush1.bf16.msra.mxu0 %v567
    %581 = vmatprep.subr.bf16.mxu0 0
    %582 = vmatpush1.bf16.msra.mxu0 %v566
    %583 = vmatprep.subr.bf16.mxu0 0
    %584 = vmatpush1.bf16.msra.mxu0 %v565
    %585 = vmatprep.subr.bf16.mxu0 0
    %586 = vmatpush1.bf16.msra.mxu0 %v564
    %587 = vmatprep.subr.bf16.mxu0 0
    %588 = vmatpush1.bf16.msra.mxu0 %v563
    %589 = vmatprep.subr.bf16.mxu0 0
    %590 = vmatpush1.bf16.msra.mxu0 %v562
    %591 = vmatprep.subr.bf16.mxu0 0
    %592 = vmatpush1.bf16.msra.mxu0 %v561
    %593 = vmatprep.subr.bf16.mxu0 0
    %594 = vmatpush2.bf16.msra.mxu0 0
    %595 = vmatprep.subr.bf16.mxu0 0
    %596 = vmatpush2.bf16.msra.mxu0 0
    %597 = vmatprep.subr.bf16.mxu0 0
    %598 = vmatpush2.bf16.msra.mxu0 0
    %599 = vmatprep.subr.bf16.mxu0 0
    %600 = vmatpush2.bf16.msra.mxu0 0
    %601 = vmatprep.subr.bf16.mxu0 0
    %602 = vmatpush2.bf16.msra.mxu0 0
    %603 = vmatprep.subr.bf16.mxu0 0
    %604 = vmatpush2.bf16.msra.mxu0 0
    %605 = vmatprep.subr.bf16.mxu0 0
    %606 = vmatpush2.bf16.msra.mxu0 0
    %607 = vmatprep.subr.bf16.mxu0 0
    %608 = vmatpush2.bf16.msra.mxu0 0
    %609 = vmatprep.mubr.bf16.mxu0 0
    %610 = vmatmul.mubr.bf16.gmra.mxu0 %v505
    %v611 = vpop.f32.mrf.mxu0
    %v612 = vadd.f32 %v527, %v611
    %v613 = vpop.f32.mrf.mxu0
    %v614 = vpop.f32.mrf.mxu0
    %v615 = vpop.f32.mrf.mxu0
    %616 = vdwg.mxu0
    %v617 = vmax.f32 %v612, 0.0
    %v618 = vpack.c.bf16 %v617, %v617
    %v619 = vld [vmem:[#allocation11] sm:$0xf]
    %v620 = vld [vmem:[#allocation11 + $0x4] sm:$0xf]
    %v621 = vld [vmem:[#allocation11 + $0x8] sm:$0xf]
    %v622 = vld [vmem:[#allocation11 + $0xc] sm:$0xf]
    %v623 = vld [vmem:[#allocation11 + $0x10] sm:$0xf]
    %v624 = vld [vmem:[#allocation11 + $0x14] sm:$0xf]
    %v625 = vld [vmem:[#allocation11 + $0x18] sm:$0xf]
    %v626 = vld [vmem:[#allocation11 + $0x1c] sm:$0xf]
    %v627 = vld [vmem:[#allocation11 + $0x20] sm:$0xf]
    %v628 = vld [vmem:[#allocation11 + $0x24] sm:$0xf]
    %v629 = vld [vmem:[#allocation11 + $0x28] sm:$0xf]
    %v630 = vld [vmem:[#allocation11 + $0x2c] sm:$0xf]
    %v631 = vld [vmem:[#allocation11 + $0x30] sm:$0xf]
    %v632 = vld [vmem:[#allocation11 + $0x34] sm:$0xf]
    %v633 = vld [vmem:[#allocation11 + $0x38] sm:$0xf]
    %v634 = vld [vmem:[#allocation11 + $0x3c] sm:$0xf]
    %v635 = vld [vmem:[%s10] sm:$0x1]
    %v637 = vlaneseq
    %v638 = vshrl.u32 %v637, 7
    %v639 = vsub.s32 0, %v638
    %v640 = vrot.slane %v635, %v639
    %v658 = vunpack.c.l.b16 %v619
    %v659 = vunpack.c.l.b16 %v620
    %v660 = vunpack.c.l.b16 %v621
    %v661 = vunpack.c.l.b16 %v622
    %v662 = vunpack.c.l.b16 %v623
    %v663 = vunpack.c.l.b16 %v624
    %v664 = vunpack.c.l.b16 %v625
    %v665 = vunpack.c.l.b16 %v626
    %v666 = vunpack.c.l.b16 %v627
    %v667 = vunpack.c.l.b16 %v628
    %v668 = vunpack.c.l.b16 %v629
    %v669 = vunpack.c.l.b16 %v630
    %v670 = vunpack.c.l.b16 %v631
    %v671 = vunpack.c.l.b16 %v632
    %v672 = vunpack.c.l.b16 %v633
    %v673 = vunpack.c.l.b16 %v634
    %v674 = vpack.c.b16 %v659, %v658
    %v675 = vpack.c.b16 %v661, %v660
    %v676 = vpack.c.b16 %v663, %v662
    %v677 = vpack.c.b16 %v665, %v664
    %v678 = vpack.c.b16 %v667, %v666
    %v679 = vpack.c.b16 %v669, %v668
    %v680 = vpack.c.b16 %v671, %v670
    %v681 = vpack.c.b16 %v673, %v672
    %690 = vmatprep.subr.bf16.mxu0 0
    %691 = vmatpush1.bf16.msra.mxu0 %v681
    %692 = vmatprep.subr.bf16.mxu0 0
    %693 = vmatpush1.bf16.msra.mxu0 %v680
    %694 = vmatprep.subr.bf16.mxu0 0
    %695 = vmatpush1.bf16.msra.mxu0 %v679
    %696 = vmatprep.subr.bf16.mxu0 0
    %697 = vmatpush1.bf16.msra.mxu0 %v678
    %698 = vmatprep.subr.bf16.mxu0 0
    %699 = vmatpush1.bf16.msra.mxu0 %v677
    %700 = vmatprep.subr.bf16.mxu0 0
    %701 = vmatpush1.bf16.msra.mxu0 %v676
    %702 = vmatprep.subr.bf16.mxu0 0
    %703 = vmatpush1.bf16.msra.mxu0 %v675
    %704 = vmatprep.subr.bf16.mxu0 0
    %705 = vmatpush1.bf16.msra.mxu0 %v674
    %706 = vmatprep.subr.bf16.mxu0 0
    %707 = vmatpush2.bf16.msra.mxu0 0
    %708 = vmatprep.subr.bf16.mxu0 0
    %709 = vmatpush2.bf16.msra.mxu0 0
    %710 = vmatprep.subr.bf16.mxu0 0
    %711 = vmatpush2.bf16.msra.mxu0 0
    %712 = vmatprep.subr.bf16.mxu0 0
    %713 = vmatpush2.bf16.msra.mxu0 0
    %714 = vmatprep.subr.bf16.mxu0 0
    %715 = vmatpush2.bf16.msra.mxu0 0
    %716 = vmatprep.subr.bf16.mxu0 0
    %717 = vmatpush2.bf16.msra.mxu0 0
    %718 = vmatprep.subr.bf16.mxu0 0
    %719 = vmatpush2.bf16.msra.mxu0 0
    %720 = vmatprep.subr.bf16.mxu0 0
    %721 = vmatpush2.bf16.msra.mxu0 0
    %722 = vmatprep.mubr.bf16.mxu0 0
    %723 = vmatmul.mubr.bf16.gmra.mxu0 %v618
    %v724 = vpop.f32.mrf.mxu0
    %v725 = vadd.f32 %v640, %v724
    %v726 = vpop.f32.mrf.mxu0
    %v727 = vpop.f32.mrf.mxu0
    %v728 = vpop.f32.mrf.mxu0
    %729 = vdwg.mxu0
    %730 = vst [vmem:[#allocation13] sm:$0xff] %v725
    // Predicated region
    $region70: #{tpu_custom_call.1} parent=1 // pred_check
      _
    $region71: #{tpu_custom_call.1} parent=1 // pred_check_branch
      %732 = sbr.rel (0) target = $region73
    $region72: #{tpu_custom_call.1} parent=1 // pred_region
      %s734 = ssub.s32 128, 128
      %735 = vsyncadd [#allocation4], %s734
      %s737 = sshll.u32 [#allocation13], 4
      %s738 = int_to_ptr.vmem [resolvable:$true] %s737
      %740 = dma.vmem_to_hbm [thread:$0]  %s738, 128, %s11, [#allocation4]
    $region73: #{tpu_custom_call.1} parent=1 // pred_fallthru
      _
    // Predicated region
    $region74: #{tpu_custom_call.1} parent=1 // pred_check
      _
    $region75: #{tpu_custom_call.1} parent=1 // pred_check_branch
      %742 = sbr.rel (0) target = $region77
    $region76: #{tpu_custom_call.1} parent=1 // pred_region
      %743 = dma.done [#allocation4], 128
    $region77: #{tpu_custom_call.1} parent=1 // pred_fallthru
      _
    %744 = vsyncpa [#allocation3], 1
    %745 = vsyncpa [#allocation6], 1
    %746 = vsyncpa [#allocation9], 1
    %747 = vsyncpa [#allocation12], 1
    %748 = vsyncpa [#allocation4], 1

</llo_original>
